<compile_context>
chip_gen: v7x
topology: tpu7x:2x2x1
jax: 0.10.0
libtpu: 0.0.40
codegen_flags: <defaults>
</compile_context>

<pallas_src>
import math

import jax
import jax.numpy as jnp
from jax.experimental import pallas as pl
from jax.experimental.pallas import tpu as pltpu


_MIN_PARALLEL = 2                 # aim for >= 2 independent grid steps (dual-TC v7x)
_TINY_BYTES = 2 * 1024 * 1024     # below this, one grid step for everything is fine


def _sublane(dtype):
    """Sublane packing granularity: 8 rows for 4-byte, 16 for 2-byte, 32 for 1-byte."""
    return max(8, 32 // jnp.dtype(dtype).itemsize)


def _vmem_capacity_bytes():
    """Physical per-core VMEM; conservative 64 MiB fallback (v7x-sized) if unknown."""
    try:
        info = pltpu.get_tpu_info()
        return int(getattr(info, "vmem_capacity_bytes", 64 * 1024 * 1024))
    except Exception:
        return 64 * 1024 * 1024


def _plan_tiles(B, C, HW, itemsize, sub, pad, budget):
    """Pick (batch_tile, channel_tile). batch_tile > 1 only when channel_tile == C."""
    row = HW * itemsize
    f32_tmp_row = HW * 4 if itemsize < 4 else 0       # possible f32 reduce temp (bf16/int8)
    strips_if_tiled = 1 if B >= _MIN_PARALLEL else 2  # carried halo vs. two-strip halo

    def live(tb, tc, n_strips):
        return (4 * tb * tc * row                 # in + out tiles, double-buffered
                + 2 * n_strips * sub * row        # halo strip(s), double-buffered
                + tb * tc * f32_tmp_row)

    total = B * C * row

    # --- whole channel axis fits in one block -------------------------------------
    if live(1, C, 0) <= budget:
        tb = 1
        for d in sorted((d for d in range(1, B + 1) if B % d == 0), reverse=True):
            if live(d, C, 0) > budget:
                continue
            # Never fold batch so far that the grid loses its >=2 parallel steps,
            # unless the whole tensor is tiny anyway.
            if B // d >= _MIN_PARALLEL or total <= _TINY_BYTES:
                tb = d
                break
        # B == 1 and a sizeable tensor: split channels in two so both TensorCores
        # (v7x) get work, at the cost of a small two-strip halo re-read.
        if (B < _MIN_PARALLEL and total > _TINY_BYTES and pad > 0
                and C % 2 == 0 and (C // 2) % sub == 0
                and live(1, C // 2, 2) <= budget):
            return 1, C // 2
        return tb, C

    # --- channel tiling required ---------------------------------------------------
    if C % sub != 0:
        # No sublane-aligned split available; best-effort single block.
        # TODO(synk): tile HW with a two-pass (accumulated) mean if this exceeds VMEM.
        return 1, C
    divs = sorted((d for d in range(sub, C, sub) if C % d == 0), reverse=True)
    for tc in divs:
        if live(1, tc, strips_if_tiled) <= budget:
            return 1, tc
    return 1, (divs[-1] if divs else C)           # smallest aligned divisor; best effort


def _build_kernels(k, pad, tc, sub, inv_hw):
    def mean_rows(ref):
        # f32-accumulated spatial mean per channel (no full-tile f32 copy intended).
        return jnp.sum(ref[...], axis=-1, dtype=jnp.float32, keepdims=True) * inv_hw

    def conv_sigmoid_scale(w_ref, x_ref, o_ref, y_ext):
        # Cross-correlation, identical to nn.Conv1d with zero padding:
        #   conv[t] = sum_j w[j] * mean[t + j - pad]
        conv = w_ref[0] * y_ext[..., 0:tc, :]
        for j in range(1, k):                     # k is tiny and static
            conv = conv + w_ref[j] * y_ext[..., j:j + tc, :]
        attn = jax.nn.sigmoid(conv)               # (..., tc, 1) f32
        o_ref[...] = x_ref[...] * attn.astype(o_ref.dtype)

    def kernel_simple(w_ref, x_ref, o_ref):
        # Whole channel axis (possibly several batch rows) in one block, or pad == 0.
        m = mean_rows(x_ref)                      # (..., tc, 1)
        if pad > 0:
            z = jnp.zeros(m.shape[:-2] + (pad, 1), jnp.float32)
            y_ext = jnp.concatenate([z, m, z], axis=-2)
        else:
            y_ext = m
        conv_sigmoid_scale(w_ref, x_ref, o_ref, y_ext)

    def kernel_halo_carry(w_ref, x_ref, xr_ref, o_ref, carry_ref):
        # Channel-tiled path (B >= 2): channel axis is "arbitrary" (sequential), the
        # left halo means are carried from the previous tile in `carry_ref`; only the
        # right-hand `sub`-channel strip of x is re-read.  Edge contributions are
        # masked to zero, reproducing the conv's zero padding exactly.
        c = pl.program_id(1)
        nc = pl.num_programs(1)
        m = mean_rows(x_ref)                      # (tc, 1)
        mr = mean_rows(xr_ref)                    # (sub, 1)
        left = jnp.where(c > 0, carry_ref[8 - pad:, :], 0.0)      # (pad, 1)
        right = jnp.where(c + 1 < nc, mr[:pad, :], 0.0)           # (pad, 1)
        y_ext = jnp.concatenate([left, m, right], axis=0)         # (pad+tc+pad, 1)
        conv_sigmoid_scale(w_ref, x_ref, o_ref, y_ext)
        carry_ref[...] = m[tc - 8:, :]            # last 8 means -> next tile's left halo

    def kernel_halo_both(w_ref, x_ref, xl_ref, xr_ref, o_ref):
        # Channel-tiled path (B == 1): fully parallel grid (both TensorCores on v7x),
        # both halo strips re-read with edge-clamped index maps + zero masking.
        c = pl.program_id(1)
        nc = pl.num_programs(1)
        m = mean_rows(x_ref)                      # (tc, 1)
        ml = mean_rows(xl_ref)                    # (sub, 1)
        mr = mean_rows(xr_ref)                    # (sub, 1)
        left = jnp.where(c > 0, ml[sub - pad:, :], 0.0)
        right = jnp.where(c + 1 < nc, mr[:pad, :], 0.0)
        y_ext = jnp.concatenate([left, m, right], axis=0)
        conv_sigmoid_scale(w_ref, x_ref, o_ref, y_ext)

    return kernel_simple, kernel_halo_carry, kernel_halo_both


def eca_block_pallas(x, conv_weight, *, channel_tile=None, vmem_budget_bytes=None):
    """x: (B, C, H, W); conv_weight: (k,) or (1, 1, k) -> (B, C, H, W)."""
    B, C, H, W = x.shape
    w32 = jnp.asarray(conv_weight, jnp.float32).reshape(-1)
    k = int(w32.shape[0])
    if k % 2 != 1:
        raise ValueError("ECA conv kernel size must be odd")
    pad = (k - 1) // 2
    if pad > 8:
        raise ValueError("conv halo larger than 8 channels is not supported")

    HW = H * W
    itemsize = jnp.dtype(x.dtype).itemsize
    sub = _sublane(x.dtype)
    cap = _vmem_capacity_bytes()
    budget = vmem_budget_bytes if vmem_budget_bytes is not None else int(cap * 0.45)

    x_flat = x.reshape(B, C, HW)          # no spatial padding: last block dim == HW

    if channel_tile is not None:
        tc = int(channel_tile)
        if C % tc != 0 or (tc < C and tc % sub != 0):
            tc = C                        # invalid request -> full-channel block
        tb = 1
    else:
        tb, tc = _plan_tiles(B, C, HW, itemsize, sub, pad, budget)

    n_c = C // tc
    use_halo = (pad > 0) and (tc < C)
    use_carry = use_halo and (B >= _MIN_PARALLEL)
    inv_hw = 1.0 / HW

    kernel_simple, kernel_halo_carry, kernel_halo_both = _build_kernels(
        k, pad, tc, sub, inv_hw)

    w_spec = pl.BlockSpec(memory_space=pltpu.MemorySpace.SMEM)
    scratch = ()

    if tc == C:
        # Case A: whole channel axis per step, batch possibly folded.
        grid = (B // tb,)
        x_spec = pl.BlockSpec((tb, C, HW), lambda b: (b, 0, 0))
        out_spec = pl.BlockSpec((tb, C, HW), lambda b: (b, 0, 0))
        in_specs = [w_spec, x_spec]
        operands = [w32, x_flat]
        kernel = kernel_simple
        semantics = ("parallel",)
        n_strips = 0
    else:
        grid = (B, n_c)
        blk = tc // sub
        n_blk = C // sub
        x_spec = pl.BlockSpec((None, tc, HW), lambda b, c: (b, c, 0))
        out_spec = pl.BlockSpec((None, tc, HW), lambda b, c: (b, c, 0))
        if not use_halo:
            # pad == 0: the channel conv is pointwise, no halo needed.
            in_specs = [w_spec, x_spec]
            operands = [w32, x_flat]
            kernel = kernel_simple
            semantics = ("parallel", "parallel")
            n_strips = 0
        else:
            xr_spec = pl.BlockSpec(
                (None, sub, HW),
                lambda b, c, _blk=blk, _nb=n_blk: (b, jnp.minimum((c + 1) * _blk, _nb - 1), 0))
            if use_carry:
                in_specs = [w_spec, x_spec, xr_spec]
                operands = [w32, x_flat, x_flat]
                scratch = (pltpu.VMEM((8, 1), jnp.float32),)     # carried left-halo means
                kernel = kernel_halo_carry
                semantics = ("parallel", "arbitrary")
                n_strips = 1
            else:
                xl_spec = pl.BlockSpec(
                    (None, sub, HW),
                    lambda b, c, _blk=blk: (b, jnp.maximum(c * _blk - 1, 0), 0))
                in_specs = [w_spec, x_spec, xl_spec, xr_spec]
                operands = [w32, x_flat, x_flat, x_flat]
                kernel = kernel_halo_both
                semantics = ("parallel", "parallel")
                n_strips = 2

    # Live-VMEM estimate: in + out tiles double-buffered, halo strips double-buffered,
    # and a possible f32 reduce temp for sub-f32 dtypes.  Cap the limit below physical
    # VMEM (leave headroom for Mosaic scratch / semaphores, esp. on v7x's 64 MiB).
    row = HW * itemsize
    live = (4 * tb * tc * row + 2 * n_strips * sub * row
            + (tb * tc * HW * 4 if itemsize < 4 else 0))
    vmem_limit = int(min(max(live * 1.4, 4 * 1024 * 1024), int(cap * 0.85)))

    halo_bytes = B * n_c * n_strips * sub * row if use_halo else 0
    cost = pl.CostEstimate(
        flops=int(2 * B * C * HW + 2 * k * B * C),
        transcendentals=int(B * C),
        bytes_accessed=int(2 * B * C * HW * itemsize + halo_bytes))

    out_flat = pl.pallas_call(
        kernel,
        out_shape=jax.ShapeDtypeStruct((B, C, HW), x.dtype),
        grid=grid,
        in_specs=in_specs,
        out_specs=out_spec,
        scratch_shapes=scratch,
        compiler_params=pltpu.CompilerParams(
            dimension_semantics=semantics,
            vmem_limit_bytes=vmem_limit),
        cost_estimate=cost,
    )(*operands)

    return out_flat.reshape(B, C, H, W)


def eca_block_reference(x, conv_weight):
    """Pure-JAX reference mirroring the PyTorch forward."""
    B, C, H, W = x.shape
    w = jnp.asarray(conv_weight, jnp.float32).reshape(-1)
    k = w.shape[0]
    pad = (k - 1) // 2
    y = jnp.mean(x.astype(jnp.float32), axis=(2, 3))            # (B, C)
    y_pad = jnp.pad(y, ((0, 0), (pad, pad)))
    conv = jnp.zeros_like(y)
    for j in range(k):
        conv = conv + w[j] * y_pad[:, j:j + C]
    attn = jax.nn.sigmoid(conv)[:, :, None, None]
    return x.astype(jnp.float32) * attn


if __name__ == "__main__":
    # Module hyper-parameters (match eca_block.__init__).
    B_COEF, GAMMA = 1, 2
    batch, channels, height, width = 2, 16, 16, 16

    kernel_size = int(abs((math.log(channels, 2) + B_COEF) / GAMMA))
    kernel_size = kernel_size if kernel_size % 2 else kernel_size + 1   # -> 3 for C=16

    key = jax.random.PRNGKey(0)
    kx, kw = jax.random.split(key)
    x = jax.random.normal(kx, (batch, channels, height, width), dtype=jnp.float32)
    # nn.Conv1d(1, 1, k, bias=False) weight has shape (1, 1, k); we keep the (k,) core.
    conv_weight = jax.random.normal(kw, (kernel_size,), dtype=jnp.float32) * 0.5

    ref = eca_block_reference(x, conv_weight)

    # 1) Default config: whole channel axis fits -> batch-folded single-step path.
    out = jax.block_until_ready(eca_block_pallas(x, conv_weight))
    assert out.shape == x.shape and out.dtype == x.dtype
    assert jnp.allclose(out, ref, atol=1e-5, rtol=1e-5), "mismatch (default config)"

    # 2) Forced channel tiling with B >= 2: exercises the carried-halo ("arbitrary") path.
    out2 = jax.block_until_ready(eca_block_pallas(x, conv_weight, channel_tile=8))
    assert jnp.allclose(out2, ref, atol=1e-5, rtol=1e-5), "mismatch (carried halo)"

    # 3) B == 1 with forced channel tiling: exercises the two-strip channel-parallel path.
    x1 = x[:1]
    out3 = jax.block_until_ready(eca_block_pallas(x1, conv_weight, channel_tile=8))
    assert jnp.allclose(out3, eca_block_reference(x1, conv_weight),
                        atol=1e-5, rtol=1e-5), "mismatch (two-strip halo)"

    # 4) Non-128-aligned H*W (10*10 = 100): unpadded, lane-masked store path.
    x4 = jax.random.normal(key, (batch, channels, 10, 10), dtype=jnp.float32)
    out4 = jax.block_until_ready(eca_block_pallas(x4, conv_weight, channel_tile=8))
    assert jnp.allclose(out4, eca_block_reference(x4, conv_weight),
                        atol=1e-5, rtol=1e-5), "mismatch (unaligned HW)"

    # 5) bf16 input, C=32, channel_tile=16 (= bf16 sublane granularity), HW=144:
    #    dtype-aware sublane rounding + carried halo + masked bf16 edge stores.
    xb = jax.random.normal(kx, (2, 32, 12, 12), dtype=jnp.float32)
    k5 = int(abs((math.log(32, 2) + B_COEF) / GAMMA))
    k5 = k5 if k5 % 2 else k5 + 1                                       # -> 3 for C=32
    wb = jax.random.normal(kw, (k5,), dtype=jnp.float32) * 0.5
    xb16 = xb.astype(jnp.bfloat16)
    out5 = jax.block_until_ready(eca_block_pallas(xb16, wb, channel_tile=16))
    ref5 = eca_block_reference(xb16.astype(jnp.float32), wb)
    assert out5.dtype == jnp.bfloat16
    assert jnp.allclose(out5.astype(jnp.float32), ref5,
                        atol=2e-2, rtol=2e-2), "mismatch (bf16 carried halo)"

    print("KERNEL_OK")
</pallas_src>

<mosaic_0001>
module attributes {stable_mosaic.version = 11 : i64} {
  func.func @kernel_simple(%arg0: i32, %arg1: memref<3xf32, #tpu.memory_space<smem>>, %arg2: memref<2x16x256xf32, #tpu.memory_space<vmem>>, %arg3: memref<2x16x256xf32, #tpu.memory_space<vmem>>) attributes {dimension_semantics = [#tpu.dimension_semantics<parallel>], iteration_bounds = array<i64: 1>, scalar_prefetch = 0 : i64, scratch_operands = 0 : i64, tpu.core_type = #tpu.core_type<tc>, window_params = [{transform_indices = @transform_0, window_bounds = array<i64: 3>}, {transform_indices = @transform_1, window_bounds = array<i64: 2, 16, 256>}, {transform_indices = @transform_2, window_bounds = array<i64: 2, 16, 256>}]} {
    %c0 = arith.constant 0 : index
    %c0_0 = arith.constant 0 : index
    %c0_1 = arith.constant 0 : index
    %0 = vector.load %arg2[%c0, %c0_0, %c0_1] : memref<2x16x256xf32, #tpu.memory_space<vmem>>, vector<2x16x256xf32>
    %cst = arith.constant dense<0.000000e+00> : vector<2x16xf32>
    %1 = vector.multi_reduction <add>, %0, %cst [2] : vector<2x16x256xf32> to vector<2x16xf32>
    %2 = vector.shape_cast %1 : vector<2x16xf32> to vector<2x16x1xf32>
    %cst_2 = arith.constant 3.906250e-03 : f32
    %3 = vector.broadcast %cst_2 : f32 to vector<2x16x1xf32>
    %4 = arith.mulf %2, %3 : vector<2x16x1xf32>
    %cst_3 = arith.constant 0.000000e+00 : f32
    %5 = vector.broadcast %cst_3 : f32 to vector<2x1x1xf32>
    %6 = tpu.concatenate %5, %4, %5 in 1 : vector<2x1x1xf32>, vector<2x16x1xf32>, vector<2x1x1xf32> -> vector<2x18x1xf32>
    %c0_4 = arith.constant 0 : index
    %7 = memref.load %arg1[%c0_4] : memref<3xf32, #tpu.memory_space<smem>>
    %8 = vector.extract_strided_slice %6 {offsets = [0, 0, 0], sizes = [2, 16, 1], strides = [1, 1, 1]} : vector<2x18x1xf32> to vector<2x16x1xf32>
    %9 = vector.broadcast %7 : f32 to vector<2x16x1xf32>
    %10 = arith.mulf %9, %8 : vector<2x16x1xf32>
    %c1 = arith.constant 1 : index
    %11 = memref.load %arg1[%c1] : memref<3xf32, #tpu.memory_space<smem>>
    %12 = vector.extract_strided_slice %6 {offsets = [0, 1, 0], sizes = [2, 16, 1], strides = [1, 1, 1]} : vector<2x18x1xf32> to vector<2x16x1xf32>
    %13 = vector.broadcast %11 : f32 to vector<2x16x1xf32>
    %14 = arith.mulf %13, %12 : vector<2x16x1xf32>
    %15 = arith.addf %10, %14 : vector<2x16x1xf32>
    %c2 = arith.constant 2 : index
    %16 = memref.load %arg1[%c2] : memref<3xf32, #tpu.memory_space<smem>>
    %17 = vector.extract_strided_slice %6 {offsets = [0, 2, 0], sizes = [2, 16, 1], strides = [1, 1, 1]} : vector<2x18x1xf32> to vector<2x16x1xf32>
    %18 = vector.broadcast %16 : f32 to vector<2x16x1xf32>
    %19 = arith.mulf %18, %17 : vector<2x16x1xf32>
    %20 = arith.addf %15, %19 : vector<2x16x1xf32>
    %21 = arith.negf %20 : vector<2x16x1xf32>
    %22 = math.exp %21 : vector<2x16x1xf32>
    %cst_5 = arith.constant 1.000000e+00 : f32
    %23 = vector.broadcast %cst_5 : f32 to vector<2x16x1xf32>
    %24 = arith.addf %23, %22 : vector<2x16x1xf32>
    %25 = arith.divf %23, %24 : vector<2x16x1xf32>
    %c0_6 = arith.constant 0 : index
    %c0_7 = arith.constant 0 : index
    %c0_8 = arith.constant 0 : index
    %26 = vector.load %arg2[%c0_6, %c0_7, %c0_8] : memref<2x16x256xf32, #tpu.memory_space<vmem>>, vector<2x16x256xf32>
    %27 = vector.broadcast %25 : vector<2x16x1xf32> to vector<2x16x256xf32>
    %28 = arith.mulf %26, %27 : vector<2x16x256xf32>
    %c0_9 = arith.constant 0 : index
    %c0_10 = arith.constant 0 : index
    %c0_11 = arith.constant 0 : index
    %29 = vector.load %arg3[%c0_9, %c0_10, %c0_11] : memref<2x16x256xf32, #tpu.memory_space<vmem>>, vector<2x16x256xf32>
    tpu.vector_store %arg3[%c0_9, %c0_10, %c0_11], %28 {strides = array<i32>} : memref<2x16x256xf32, #tpu.memory_space<vmem>>, vector<2x16x256xf32>,
    return
  }
  func.func @transform_0(%arg0: i32) -> i32 {
    %c0_i32 = arith.constant 0 : i32
    %c0_i32_0 = arith.constant 0 : i32
    return %c0_i32 : i32
  }
  func.func @transform_1(%arg0: i32) -> (i32, i32, i32) {
    %c0_i32 = arith.constant 0 : i32
    %c0_i32_0 = arith.constant 0 : i32
    %c0_i32_1 = arith.constant 0 : i32
    return %arg0, %c0_i32, %c0_i32_0 : i32, i32, i32
  }
  func.func @transform_2(%arg0: i32) -> (i32, i32, i32) {
    %c0_i32 = arith.constant 0 : i32
    %c0_i32_0 = arith.constant 0 : i32
    %c0_i32_1 = arith.constant 0 : i32
    return %arg0, %c0_i32, %c0_i32_0 : i32, i32, i32
  }
}

</mosaic_0001>

<llo_original>
// kernel: tpu_custom_call.1
$region0: #{tpu_custom_call.1}
  #allocation0 [shape = 'u32[]', space=smem, size = 0x4, offset = 0x4, fixed_abs, tag = 'smem constant byte address 0x4 - core index']
  #allocation1 [shape = 'u32[144,128]{1,0:T(1,128)}', space=vmem, size = 0x12000, scoped, tag = 'internal scratch']
  %s0 = inlined_call_operand.hbm [shape: f32[3], index: 0, kind: input, shape index: {}]
  %s1 = inlined_call_operand.hbm [shape: f32[2,16,256], index: 1, kind: input, shape index: {}]
  %s2 = inlined_call_operand.hbm [shape: f32[2,16,256], index: 2, kind: output, shape index: {}]
  %s3 = sld [smem:[#allocation0]]
  $region26: #{tpu_custom_call.1} parent=0
    _
  %s5 = ssub.s32 1, %s3
  %s6 = scalar_select 0, %s5, %s3
  $region1: #{tpu_custom_call.1} parent=0
    #allocation2 [shape = 'u8[512]{0}', space=smem, size = 0x200, scoped, tag = 'input window, operand 0, single buffered']
    #allocation3 [shape = 's32[1]{0}', space=sflag, size = 0x4, scoped, tag = 'scoped memory for tpu_custom_call.1']
    #allocation4 [shape = 's32[1]{0}', space=sflag, size = 0x4, scoped, tag = 'scoped memory for tpu_custom_call.1']
    #allocation5 [shape = 's32[1]{0}', space=sflag, size = 0x4, scoped, tag = 'scoped memory for tpu_custom_call.1']
    #allocation6 [shape = 'u8[32768]{0}', space=vmem, size = 0x8000, scoped, tag = 'input window, operand 1, single buffered']
    #allocation7 [shape = 'u8[32768]{0}', space=vmem, size = 0x8000, scoped, tag = 'output window, operand 0, single buffered']
    %7 = vsyncpa [#allocation5], 0
    %8 = vsyncpa [#allocation3], 0
    %9 = vsyncpa [#allocation4], 0
    // Predicated region
    $region2: #{tpu_custom_call.1} parent=1 // pred_check
      _
    $region3: #{tpu_custom_call.1} parent=1 // pred_check_branch
      %11 = sbr.rel (0) target = $region5
    $region4: #{tpu_custom_call.1} parent=1 // pred_region
      %s13 = ssub.s32 16, 16
      %14 = vsyncadd [#allocation5], %s13
      %17 = dma.hbm_to_smem %s0, 16, [#allocation2], [#allocation5]
    $region5: #{tpu_custom_call.1} parent=1 // pred_fallthru
      _
    // Predicated region
    $region6: #{tpu_custom_call.1} parent=1 // pred_check
      _
    $region7: #{tpu_custom_call.1} parent=1 // pred_check_branch
      %19 = sbr.rel (0) target = $region9
    $region8: #{tpu_custom_call.1} parent=1 // pred_region
      %s21 = ssub.s32 1024, 1024
      %22 = vsyncadd [#allocation3], %s21
      %s23 = sshll.u32 [#allocation6], 4
      %s24 = int_to_ptr.vmem [resolvable:$true] %s23
      %29 = dma.hbm_to_vmem [thread:$0]  %s1, 1024, %s24, [#allocation3], 256, 256, 16
    $region9: #{tpu_custom_call.1} parent=1 // pred_fallthru
      _
    // Predicated region
    $region10: #{tpu_custom_call.1} parent=1 // pred_check
      _
    $region11: #{tpu_custom_call.1} parent=1 // pred_check_branch
      %31 = sbr.rel (0) target = $region13
    $region12: #{tpu_custom_call.1} parent=1 // pred_region
      %32 = dma.done [#allocation5], 16
    $region13: #{tpu_custom_call.1} parent=1 // pred_fallthru
      _
    // Predicated region
    $region14: #{tpu_custom_call.1} parent=1 // pred_check
      _
    $region15: #{tpu_custom_call.1} parent=1 // pred_check_branch
      %34 = sbr.rel (0) target = $region17
    $region16: #{tpu_custom_call.1} parent=1 // pred_region
      %35 = dma.done [#allocation3], 1024
    $region17: #{tpu_custom_call.1} parent=1 // pred_fallthru
      _
    %36 = sfence
    %v37 = vld [vmem:[#allocation6] sm:$0xff]
    %v38 = vld [vmem:[#allocation6 + $0x8] sm:$0xff]
    %v39 = vld [vmem:[#allocation6 + $0x10] sm:$0xff]
    %v40 = vld [vmem:[#allocation6 + $0x18] sm:$0xff]
    %v41 = vld [vmem:[#allocation6 + $0x20] sm:$0xff]
    %v42 = vld [vmem:[#allocation6 + $0x28] sm:$0xff]
    %v43 = vld [vmem:[#allocation6 + $0x30] sm:$0xff]
    %v44 = vld [vmem:[#allocation6 + $0x38] sm:$0xff]
    %v45 = vadd.f32 %v37, %v38
    %46 = vadd.xlane.f32.xlu0 %v45
    %v47 = vpop.xlane.xlu0 %46
    %v48 = vadd.f32 %v39, %v40
    %49 = vadd.xlane.f32.xlu0 %v48
    %v50 = vpop.xlane.xlu0 %49
    %v51 = vadd.f32 %v41, %v42
    %52 = vadd.xlane.f32.xlu0 %v51
    %v53 = vpop.xlane.xlu0 %52
    %v54 = vadd.f32 %v43, %v44
    %55 = vadd.xlane.f32.xlu0 %v54
    %v56 = vpop.xlane.xlu0 %55
    %v57 = vmul.f32 %v47, 0.00390625
    %v58 = vmul.f32 %v50, 0.00390625
    %v59 = vmul.f32 %v53, 0.00390625
    %v60 = vmul.f32 %v56, 0.00390625
    %vm65 = vcmask 1040384
    %v66 = vrot.slane %v57, 7
    %v67 = vrot.slane %v58, 7
    %v68 = vsel %vm65, %v66, %v67
    %v69 = vrot.slane %v59, 7
    %v70 = vrot.slane %v60, 7
    %v71 = vsel %vm65, %v69, %v70
    %v78 = vsel %vm65, 0.0, %v66
    %v79 = vsel %vm65, 0.0, %v69
    %v80 = vsel %vm65, %v67, 0.0
    %v81 = vsel %vm65, %v70, 0.0
    %s82 = sld [smem:[#allocation2]]
    %v83 = vstv %s82
    %v84 = vmul.f32 %v83, %v78
    %v85 = vmul.f32 %v83, %v68
    %v86 = vmul.f32 %v83, %v79
    %v87 = vmul.f32 %v83, %v71
    %s88 = sld [smem:[#allocation2 + $0x1]]
    %v89 = vstv %s88
    %v90 = vmul.f32 %v89, %v78
    %v91 = vmul.f32 %v89, %v68
    %v92 = vmul.f32 %v89, %v80
    %v93 = vmul.f32 %v89, %v79
    %v94 = vmul.f32 %v89, %v71
    %v95 = vmul.f32 %v89, %v81
    %vm102 = vcmask 1046528
    %v103 = vrot.slane %v90, 1
    %v104 = vrot.slane %v91, 1
    %v105 = vsel %vm102, %v103, %v104
    %v106 = vrot.slane %v92, 1
    %v107 = vsel %vm102, %v104, %v106
    %v108 = vrot.slane %v93, 1
    %v109 = vrot.slane %v94, 1
    %v110 = vsel %vm102, %v108, %v109
    %v111 = vrot.slane %v95, 1
    %v112 = vsel %vm102, %v109, %v111
    %v117 = vadd.f32 %v84, %v105
    %v118 = vadd.f32 %v85, %v107
    %v119 = vadd.f32 %v86, %v110
    %v120 = vadd.f32 %v87, %v112
    %s121 = sld [smem:[#allocation2 + $0x2]]
    %v122 = vstv %s121
    %v123 = vmul.f32 %v122, %v78
    %v124 = vmul.f32 %v122, %v68
    %v125 = vmul.f32 %v122, %v80
    %v126 = vmul.f32 %v122, %v79
    %v127 = vmul.f32 %v122, %v71
    %v128 = vmul.f32 %v122, %v81
    %vm135 = vcmask 1045504
    %v136 = vrot.slane %v123, 2
    %v137 = vrot.slane %v124, 2
    %v138 = vsel %vm135, %v136, %v137
    %v139 = vrot.slane %v125, 2
    %v140 = vsel %vm135, %v137, %v139
    %v141 = vrot.slane %v126, 2
    %v142 = vrot.slane %v127, 2
    %v143 = vsel %vm135, %v141, %v142
    %v144 = vrot.slane %v128, 2
    %v145 = vsel %vm135, %v142, %v144
    %v150 = vadd.f32 %v117, %v138
    %v151 = vadd.f32 %v118, %v140
    %v152 = vadd.f32 %v119, %v143
    %v153 = vadd.f32 %v120, %v145
    %v154 = vxor.u32 %v150, 2147483648
    %v155 = vxor.u32 %v151, 2147483648
    %v156 = vxor.u32 %v152, 2147483648
    %v157 = vxor.u32 %v153, 2147483648
    %v158 = vmul.f32 %v154, 1.442695
    %v159 = vpow.pop %v158
    %v160 = vmul.f32 %v155, 1.442695
    %v161 = vpow.pop %v160
    %v162 = vmul.f32 %v156, 1.442695
    %v163 = vpow.pop %v162
    %v164 = vmul.f32 %v157, 1.442695
    %v165 = vpow.pop %v164
    %v166 = vadd.f32 %v159, 1.0
    %v167 = vadd.f32 %v161, 1.0
    %v168 = vadd.f32 %v163, 1.0
    %v169 = vadd.f32 %v165, 1.0
    %v170 = vrcp.pop %v166
    %v171 = vmul.f32 1.0, %v170
    %v172 = vrcp.pop %v167
    %v173 = vmul.f32 1.0, %v172
    %v174 = vrcp.pop %v168
    %v175 = vmul.f32 1.0, %v174
    %v176 = vrcp.pop %v169
    %v177 = vmul.f32 1.0, %v176
    %179 = vset.pattern.permute.xlu0 0
    %180 = vperm.xlu0 %179, %v171
    %v181 = vpop.permute.xlu0 %180
    %184 = vset.pattern.permute.xlu0 0
    %185 = vperm.xlu0 %184, %v173
    %v186 = vpop.permute.xlu0 %185
    %189 = vset.pattern.permute.xlu0 0
    %190 = vperm.xlu0 %189, %v175
    %v191 = vpop.permute.xlu0 %190
    %194 = vset.pattern.permute.xlu0 0
    %195 = vperm.xlu0 %194, %v177
    %v196 = vpop.permute.xlu0 %195
    %v198 = vmul.f32 %v37, %v181
    %v199 = vmul.f32 %v38, %v181
    %v200 = vmul.f32 %v39, %v186
    %v201 = vmul.f32 %v40, %v186
    %v202 = vmul.f32 %v41, %v191
    %v203 = vmul.f32 %v42, %v191
    %v204 = vmul.f32 %v43, %v196
    %v205 = vmul.f32 %v44, %v196
    %206 = vst [vmem:[#allocation7] sm:$0xff] %v198
    %207 = vst [vmem:[#allocation7 + $0x8] sm:$0xff] %v199
    %208 = vst [vmem:[#allocation7 + $0x10] sm:$0xff] %v200
    %209 = vst [vmem:[#allocation7 + $0x18] sm:$0xff] %v201
    %210 = vst [vmem:[#allocation7 + $0x20] sm:$0xff] %v202
    %211 = vst [vmem:[#allocation7 + $0x28] sm:$0xff] %v203
    %212 = vst [vmem:[#allocation7 + $0x30] sm:$0xff] %v204
    %213 = vst [vmem:[#allocation7 + $0x38] sm:$0xff] %v205
    // Predicated region
    $region18: #{tpu_custom_call.1} parent=1 // pred_check
      _
    $region19: #{tpu_custom_call.1} parent=1 // pred_check_branch
      %215 = sbr.rel (0) target = $region21
    $region20: #{tpu_custom_call.1} parent=1 // pred_region
      %s217 = ssub.s32 1024, 1024
      %218 = vsyncadd [#allocation4], %s217
      %s219 = sshll.u32 [#allocation7], 4
      %s220 = int_to_ptr.vmem [resolvable:$true] %s219
      %225 = dma.vmem_to_hbm [thread:$0]  %s220, 1024, %s2, [#allocation4], 256, 256, 16
    $region21: #{tpu_custom_call.1} parent=1 // pred_fallthru
      _
    // Predicated region
    $region22: #{tpu_custom_call.1} parent=1 // pred_check
      _
    $region23: #{tpu_custom_call.1} parent=1 // pred_check_branch
      %227 = sbr.rel (0) target = $region25
    $region24: #{tpu_custom_call.1} parent=1 // pred_region
      %228 = dma.done [#allocation4], 1024
    $region25: #{tpu_custom_call.1} parent=1 // pred_fallthru
      _
    %229 = vsyncpa [#allocation3], 1
    %230 = vsyncpa [#allocation4], 1
    %231 = vsyncpa [#allocation5], 1

</llo_original>
